<compile_context>
chip_gen: v5e
topology: v5e:2x2
jax: 0.10.0
libtpu: 0.0.40
codegen_flags: <defaults>
</compile_context>

<pallas_src>
import jax
import jax.numpy as jnp
from jax.experimental import pallas as pl
from jax.experimental.pallas import tpu as pltpu


# Offsets folded from the "(cb|cr) - 128/255" centering.
_R_OFF = 1.402 * 128.0 / 255.0
_G_OFF = (0.344136 + 0.714136) * 128.0 / 255.0
_B_OFF = 1.772 * 128.0 / 255.0

_LANE = 128
_TARGET_BLOCK_BYTES = 2 * 1024 * 1024  # ~2 MiB per operand per grid step


def _ycbcr_to_rgb_kernel(x_ref, o_ref):
    # Block is (bb, 3, tr, lane); each channel view is (bb, tr, lane),
    # sublane/lane dense.  HBM-bandwidth bound elementwise math.
    y = x_ref[:, 0].astype(jnp.float32)
    cb = x_ref[:, 1].astype(jnp.float32)
    cr = x_ref[:, 2].astype(jnp.float32)

    o_ref[:, 0] = (y + 1.402 * cr - _R_OFF).astype(o_ref.dtype)
    o_ref[:, 1] = (y - 0.344136 * cb - 0.714136 * cr + _G_OFF).astype(o_ref.dtype)
    o_ref[:, 2] = (y + 1.772 * cb - _B_OFF).astype(o_ref.dtype)


def _choose_tiling(n: int, batch: int, itemsize: int):
    """Pick (lane, rows, n_pad, tr, bb) for flattened spatial size n."""
    # Lane (last-dim) width: multiple of 128; prefer one dividing n so the
    # wrapper needs no pad/slice copies for common resolutions.
    if n <= 512:
        lane = ((n + _LANE - 1) // _LANE) * _LANE
    elif n % 512 == 0:
        lane = 512
    elif n % 256 == 0:
        lane = 256
    elif n % 128 == 0:
        lane = 128
    else:
        lane = 512  # odd size: pad the flattened spatial dim up to a lane multiple
    n_pad = ((n + lane - 1) // lane) * lane
    rows = n_pad // lane

    # Rows per block sized for ~2 MiB per operand (3 channels per block).
    tr = max(8, _TARGET_BLOCK_BYTES // (3 * lane * itemsize))
    tr = (tr // 8) * 8  # sublane multiple when it does not span all rows
    if tr >= rows:
        tr = rows  # block dim equals full array dim (always legal)

    # If one image's planes fit in a block, pack several batch elements per step.
    bb = 1
    if tr == rows:
        bb = max(1, _TARGET_BLOCK_BYTES // (3 * rows * lane * itemsize))
        bb = min(bb, batch)
    return lane, rows, n_pad, tr, bb


def ycbcr_to_rgb(image: jax.Array) -> jax.Array:
    """Convert a YCbCr image (*, 3, H, W), values in (0, 1), to RGB."""
    if image.ndim < 3 or image.shape[-3] != 3:
        raise ValueError(
            "Input size must have a shape of (*, 3, H, W). Got {}".format(image.shape)
        )

    orig_shape = image.shape
    H, W = orig_shape[-2], orig_shape[-1]
    n = H * W

    # Collapse leading dims; flatten spatial dims (contiguous -> free reshape).
    x = image.reshape((-1, 3, n))
    B = x.shape[0]

    lane, rows, n_pad, tr, bb = _choose_tiling(n, B, x.dtype.itemsize)
    if n_pad != n:
        x = jnp.pad(x, ((0, 0), (0, 0), (0, n_pad - n)))
    x4 = x.reshape(B, 3, rows, lane)

    grid = (pl.cdiv(B, bb), pl.cdiv(rows, tr))  # ragged tails handled by Pallas

    out4 = pl.pallas_call(
        _ycbcr_to_rgb_kernel,
        out_shape=jax.ShapeDtypeStruct((B, 3, rows, lane), x4.dtype),
        grid_spec=pltpu.PrefetchScalarGridSpec(
            num_scalar_prefetch=0,
            grid=grid,
            in_specs=[pl.BlockSpec((bb, 3, tr, lane), lambda b, r: (b, 0, r, 0))],
            out_specs=pl.BlockSpec((bb, 3, tr, lane), lambda b, r: (b, 0, r, 0)),
        ),
        compiler_params=pltpu.CompilerParams(
            dimension_semantics=("parallel", "parallel"),
            vmem_limit_bytes=32 * 1024 * 1024,
        ),
    )(x4)

    out = out4.reshape(B, 3, n_pad)
    if n_pad != n:
        out = out[:, :, :n]
    return out.reshape(orig_shape)


def _ycbcr_to_rgb_ref(image: jax.Array) -> jax.Array:
    """Pure-JAX reference mirroring the PyTorch implementation."""
    y = image[..., 0, :, :]
    cb = image[..., 1, :, :]
    cr = image[..., 2, :, :]
    cb_ = cb - 128.0 / 255.0
    cr_ = cr - 128.0 / 255.0
    r = y + 1.402 * cr_
    g = y - 0.344136 * cb_ - 0.714136 * cr_
    b = y + 1.772 * cb_
    return jnp.stack([r, g, b], axis=-3)


if __name__ == "__main__":
    key = jax.random.PRNGKey(0)

    # Primary small test: (B, 3, H, W) image in (0, 1).
    x = jax.random.uniform(key, (2, 3, 16, 16), dtype=jnp.float32)
    out = ycbcr_to_rgb(x)
    jax.block_until_ready(out)
    ref = _ycbcr_to_rgb_ref(x)
    assert out.shape == x.shape
    assert jnp.allclose(out, ref, atol=1e-5, rtol=1e-5)

    # Secondary test exercising the padded / odd-spatial-size path.
    x2 = jax.random.uniform(jax.random.PRNGKey(1), (1, 3, 24, 40), dtype=jnp.float32)
    out2 = ycbcr_to_rgb(x2)
    jax.block_until_ready(out2)
    ref2 = _ycbcr_to_rgb_ref(x2)
    assert out2.shape == x2.shape
    assert jnp.allclose(out2, ref2, atol=1e-5, rtol=1e-5)

    # Third test: larger spatial size exercising the row-tiled (tr < rows) path
    # and extra leading batch dims.
    x3 = jax.random.uniform(jax.random.PRNGKey(2), (2, 2, 3, 64, 128), dtype=jnp.float32)
    out3 = ycbcr_to_rgb(x3)
    jax.block_until_ready(out3)
    ref3 = _ycbcr_to_rgb_ref(x3)
    assert out3.shape == x3.shape
    assert jnp.allclose(out3, ref3, atol=1e-5, rtol=1e-5)

    print("KERNEL_OK")
</pallas_src>

<mosaic_0001>
module attributes {stable_mosaic.version = 11 : i64} {
  func.func @_ycbcr_to_rgb_kernel(%arg0: i32, %arg1: i32, %arg2: memref<2x3x1x256xf32, #tpu.memory_space<vmem>>, %arg3: memref<2x3x1x256xf32, #tpu.memory_space<vmem>>) attributes {dimension_semantics = [#tpu.dimension_semantics<parallel>, #tpu.dimension_semantics<parallel>], iteration_bounds = array<i64: 1, 1>, scalar_prefetch = 0 : i64, scratch_operands = 0 : i64, tpu.core_type = #tpu.core_type<tc>, window_params = [{transform_indices = @transform_0, window_bounds = array<i64: 2, 3, 1, 256>}, {transform_indices = @transform_1, window_bounds = array<i64: 2, 3, 1, 256>}]} {
    %c0 = arith.constant 0 : index
    %c0_0 = arith.constant 0 : index
    %c0_1 = arith.constant 0 : index
    %c0_2 = arith.constant 0 : index
    %0 = vector.load %arg2[%c0, %c0_0, %c0_1, %c0_2] : memref<2x3x1x256xf32, #tpu.memory_space<vmem>>, vector<2x1x1x256xf32>
    %1 = vector.shape_cast %0 : vector<2x1x1x256xf32> to vector<2x1x256xf32>
    %c0_3 = arith.constant 0 : index
    %c1 = arith.constant 1 : index
    %c0_4 = arith.constant 0 : index
    %c0_5 = arith.constant 0 : index
    %2 = vector.load %arg2[%c0_3, %c1, %c0_4, %c0_5] : memref<2x3x1x256xf32, #tpu.memory_space<vmem>>, vector<2x1x1x256xf32>
    %3 = vector.shape_cast %2 : vector<2x1x1x256xf32> to vector<2x1x256xf32>
    %c0_6 = arith.constant 0 : index
    %c2 = arith.constant 2 : index
    %c0_7 = arith.constant 0 : index
    %c0_8 = arith.constant 0 : index
    %4 = vector.load %arg2[%c0_6, %c2, %c0_7, %c0_8] : memref<2x3x1x256xf32, #tpu.memory_space<vmem>>, vector<2x1x1x256xf32>
    %5 = vector.shape_cast %4 : vector<2x1x1x256xf32> to vector<2x1x256xf32>
    %cst = arith.constant 1.402000e+00 : f32
    %6 = vector.broadcast %cst : f32 to vector<2x1x256xf32>
    %7 = arith.mulf %6, %5 : vector<2x1x256xf32>
    %8 = arith.addf %1, %7 : vector<2x1x256xf32>
    %cst_9 = arith.constant 7.037490e-01 : f32
    %9 = vector.broadcast %cst_9 : f32 to vector<2x1x256xf32>
    %10 = arith.subf %8, %9 : vector<2x1x256xf32>
    %c0_10 = arith.constant 0 : index
    %c0_11 = arith.constant 0 : index
    %c0_12 = arith.constant 0 : index
    %c0_13 = arith.constant 0 : index
    %11 = vector.load %arg3[%c0_10, %c0_11, %c0_12, %c0_13] : memref<2x3x1x256xf32, #tpu.memory_space<vmem>>, vector<2x1x1x256xf32>
    %12 = vector.shape_cast %11 : vector<2x1x1x256xf32> to vector<2x1x256xf32>
    %13 = vector.shape_cast %10 : vector<2x1x256xf32> to vector<2x1x1x256xf32>
    tpu.vector_store %arg3[%c0_10, %c0_11, %c0_12, %c0_13], %13 {strides = array<i32>} : memref<2x3x1x256xf32, #tpu.memory_space<vmem>>, vector<2x1x1x256xf32>,
    %cst_14 = arith.constant 3.441360e-01 : f32
    %14 = vector.broadcast %cst_14 : f32 to vector<2x1x256xf32>
    %15 = arith.mulf %14, %3 : vector<2x1x256xf32>
    %16 = arith.subf %1, %15 : vector<2x1x256xf32>
    %cst_15 = arith.constant 7.141360e-01 : f32
    %17 = vector.broadcast %cst_15 : f32 to vector<2x1x256xf32>
    %18 = arith.mulf %17, %5 : vector<2x1x256xf32>
    %19 = arith.subf %16, %18 : vector<2x1x256xf32>
    %cst_16 = arith.constant 5.312110e-01 : f32
    %20 = vector.broadcast %cst_16 : f32 to vector<2x1x256xf32>
    %21 = arith.addf %19, %20 : vector<2x1x256xf32>
    %c0_17 = arith.constant 0 : index
    %c1_18 = arith.constant 1 : index
    %c0_19 = arith.constant 0 : index
    %c0_20 = arith.constant 0 : index
    %22 = vector.load %arg3[%c0_17, %c1_18, %c0_19, %c0_20] : memref<2x3x1x256xf32, #tpu.memory_space<vmem>>, vector<2x1x1x256xf32>
    %23 = vector.shape_cast %22 : vector<2x1x1x256xf32> to vector<2x1x256xf32>
    %24 = vector.shape_cast %21 : vector<2x1x256xf32> to vector<2x1x1x256xf32>
    tpu.vector_store %arg3[%c0_17, %c1_18, %c0_19, %c0_20], %24 {strides = array<i32>} : memref<2x3x1x256xf32, #tpu.memory_space<vmem>>, vector<2x1x1x256xf32>,
    %cst_21 = arith.constant 1.772000e+00 : f32
    %25 = vector.broadcast %cst_21 : f32 to vector<2x1x256xf32>
    %26 = arith.mulf %25, %3 : vector<2x1x256xf32>
    %27 = arith.addf %1, %26 : vector<2x1x256xf32>
    %cst_22 = arith.constant 0.889474511 : f32
    %28 = vector.broadcast %cst_22 : f32 to vector<2x1x256xf32>
    %29 = arith.subf %27, %28 : vector<2x1x256xf32>
    %c0_23 = arith.constant 0 : index
    %c2_24 = arith.constant 2 : index
    %c0_25 = arith.constant 0 : index
    %c0_26 = arith.constant 0 : index
    %30 = vector.load %arg3[%c0_23, %c2_24, %c0_25, %c0_26] : memref<2x3x1x256xf32, #tpu.memory_space<vmem>>, vector<2x1x1x256xf32>
    %31 = vector.shape_cast %30 : vector<2x1x1x256xf32> to vector<2x1x256xf32>
    %32 = vector.shape_cast %29 : vector<2x1x256xf32> to vector<2x1x1x256xf32>
    tpu.vector_store %arg3[%c0_23, %c2_24, %c0_25, %c0_26], %32 {strides = array<i32>} : memref<2x3x1x256xf32, #tpu.memory_space<vmem>>, vector<2x1x1x256xf32>,
    return
  }
  func.func @transform_0(%arg0: i32, %arg1: i32) -> (i32, i32, i32, i32) {
    %c0_i32 = arith.constant 0 : i32
    %c0_i32_0 = arith.constant 0 : i32
    %c0_i32_1 = arith.constant 0 : i32
    return %arg0, %c0_i32, %arg1, %c0_i32_0 : i32, i32, i32, i32
  }
  func.func @transform_1(%arg0: i32, %arg1: i32) -> (i32, i32, i32, i32) {
    %c0_i32 = arith.constant 0 : i32
    %c0_i32_0 = arith.constant 0 : i32
    %c0_i32_1 = arith.constant 0 : i32
    return %arg0, %c0_i32, %arg1, %c0_i32_0 : i32, i32, i32, i32
  }
}

</mosaic_0001>

<llo_original>
// kernel: tpu_custom_call.1
$region0: #{tpu_custom_call.1}
  #allocation0 [shape = 'u32[]', space=smem, size = 0x4, offset = 0x4, fixed_abs, tag = 'smem constant byte address 0x4 - core index']
  #allocation1 [shape = 'u32[72,128]{1,0:T(1,128)}', space=vmem, size = 0x9000, scoped, tag = 'internal scratch']
  %s0 = inlined_call_operand.hbm [shape: f32[2,3,1,256], index: 0, kind: input, shape index: {}]
  %s1 = inlined_call_operand.hbm [shape: f32[2,3,1,256], index: 1, kind: output, shape index: {}]
  %s2 = sld [smem:[#allocation0]]
  $region18: #{tpu_custom_call.1} parent=0
    _
  %s4 = ssub.s32 1, %s2
  %s5 = scalar_select 0, %s4, %s2
  $region1: #{tpu_custom_call.1} parent=0
    #allocation2 [shape = 'u8[6144]{0}', space=vmem, size = 0x1800, scoped, tag = 'input window, operand 0, single buffered']
    #allocation3 [shape = 's32[1]{0}', space=sflag, size = 0x4, scoped, tag = 'scoped memory for tpu_custom_call.1']
    #allocation4 [shape = 's32[1]{0}', space=sflag, size = 0x4, scoped, tag = 'scoped memory for tpu_custom_call.1']
    #allocation5 [shape = 'u8[6144]{0}', space=vmem, size = 0x1800, scoped, tag = 'output window, operand 0, single buffered']
    %6 = vsyncpa [#allocation3], 0
    %7 = vsyncpa [#allocation4], 0
    // Predicated region
    $region2: #{tpu_custom_call.1} parent=1 // pred_check
      _
    $region3: #{tpu_custom_call.1} parent=1 // pred_check_branch
      %9 = sbr.rel (0) target = $region5
    $region4: #{tpu_custom_call.1} parent=1 // pred_region
      %11 = vsyncadd [#allocation3], 0
      %s12 = sshll.u32 %s0, 4
      %s13 = int_to_ptr.hbm [resolvable:$true] %s12
      %s14 = sshll.u32 [#allocation2], 4
      %s15 = int_to_ptr.vmem [resolvable:$true] %s14
      %20 = dma.hbm_to_vmem [thread:$0]  %s13, 192, %s15, [#allocation3], 32, 32, 2
    $region5: #{tpu_custom_call.1} parent=1 // pred_fallthru
      _
    // Predicated region
    $region6: #{tpu_custom_call.1} parent=1 // pred_check
      _
    $region7: #{tpu_custom_call.1} parent=1 // pred_check_branch
      %22 = sbr.rel (0) target = $region9
    $region8: #{tpu_custom_call.1} parent=1 // pred_region
      %24 = dma.done [#allocation3], 192
    $region9: #{tpu_custom_call.1} parent=1 // pred_fallthru
      _
    %v25 = vld [vmem:[#allocation2] sm:$0x3]
    %v26 = vld [vmem:[#allocation2 + $0x6] sm:$0x3]
    %s27 = scalar_lea.vmem [#allocation2], 2
    %v28 = vld [vmem:[%s27] sm:$0x3]
    %v29 = vld [vmem:[%s27 + $0x6] sm:$0x3]
    %s30 = scalar_lea.vmem [#allocation2], 4
    %v31 = vld [vmem:[%s30] sm:$0x3]
    %v32 = vld [vmem:[%s30 + $0x6] sm:$0x3]
    %v33 = vmul.f32 %v31, 1.402
    %v34 = vmul.f32 %v32, 1.402
    %v35 = vadd.f32 %v25, %v33
    %v36 = vadd.f32 %v26, %v34
    %v37 = vsub.f32 %v35, 0.703749
    %v38 = vsub.f32 %v36, 0.703749
    %v39 = vlaneseq
    %vm40 = vcmp.ge.s32.totalorder %v39, 0
    %vm41 = vcmp.lt.s32.totalorder %v39, 256
    %vm42 = vmand %vm40, %vm41
    %43 = vst.msk [vmem:[#allocation5] sm:$0x3] %vm42, %v37
    %44 = vst.msk [vmem:[#allocation5 + $0x6] sm:$0x3] %vm42, %v38
    %v45 = vmul.f32 %v28, 0.344136
    %v46 = vmul.f32 %v29, 0.344136
    %v47 = vsub.f32 %v25, %v45
    %v48 = vsub.f32 %v26, %v46
    %v49 = vmul.f32 %v31, 0.714136
    %v50 = vmul.f32 %v32, 0.714136
    %v51 = vsub.f32 %v47, %v49
    %v52 = vsub.f32 %v48, %v50
    %v53 = vadd.f32 %v51, 0.531211
    %v54 = vadd.f32 %v52, 0.531211
    %s55 = scalar_lea.vmem [#allocation5], 2
    %56 = vst.msk [vmem:[%s55] sm:$0x3] %vm42, %v53
    %57 = vst.msk [vmem:[%s55 + $0x6] sm:$0x3] %vm42, %v54
    %v58 = vmul.f32 %v28, 1.772
    %v59 = vmul.f32 %v29, 1.772
    %v60 = vadd.f32 %v25, %v58
    %v61 = vadd.f32 %v26, %v59
    %v62 = vsub.f32 %v60, 0.8894745
    %v63 = vsub.f32 %v61, 0.8894745
    %s64 = scalar_lea.vmem [#allocation5], 4
    %65 = vst.msk [vmem:[%s64] sm:$0x3] %vm42, %v62
    %66 = vst.msk [vmem:[%s64 + $0x6] sm:$0x3] %vm42, %v63
    // Predicated region
    $region10: #{tpu_custom_call.1} parent=1 // pred_check
      _
    $region11: #{tpu_custom_call.1} parent=1 // pred_check_branch
      %68 = sbr.rel (0) target = $region13
    $region12: #{tpu_custom_call.1} parent=1 // pred_region
      %70 = vsyncadd [#allocation4], 0
      %s71 = sshll.u32 [#allocation5], 4
      %s72 = int_to_ptr.vmem [resolvable:$true] %s71
      %s73 = sshll.u32 %s1, 4
      %s74 = int_to_ptr.hbm [resolvable:$true] %s73
      %79 = dma.vmem_to_hbm [thread:$0]  %s72, 192, %s74, [#allocation4], 32, 32, 2
    $region13: #{tpu_custom_call.1} parent=1 // pred_fallthru
      _
    // Predicated region
    $region14: #{tpu_custom_call.1} parent=1 // pred_check
      _
    $region15: #{tpu_custom_call.1} parent=1 // pred_check_branch
      %81 = sbr.rel (0) target = $region17
    $region16: #{tpu_custom_call.1} parent=1 // pred_region
      %83 = dma.done [#allocation4], 192
    $region17: #{tpu_custom_call.1} parent=1 // pred_fallthru
      _
    %84 = vsyncpa [#allocation3], 1
    %85 = vsyncpa [#allocation4], 1

</llo_original>
